<compile_context>
chip_gen: v5e
topology: v5e:2x2
jax: 0.10.0
libtpu: 0.0.40
codegen_flags: <defaults>
</compile_context>

<pallas_src>
import jax
import jax.numpy as jnp
from jax.experimental import pallas as pl
from jax.experimental.pallas import tpu as pltpu


def _round_up(x, m):
    return (x + m - 1) // m * m


# -----------------------------------------------------------------------------
# Kernel.  grid = (token_tiles, num_layers); layer axis is innermost.
# act_ref (f32 VMEM scratch) carries the running activation across layers.
# -----------------------------------------------------------------------------
def _fused_layers_kernel(x_ref, w1_ref, w2_ref, b1_ref, b2_ref, a1_ref, bb1_ref,
                         o_ref, act_ref):
    l = pl.program_id(1)

    @pl.when(l == 0)
    def _():
        act_ref[...] = x_ref[...].astype(jnp.float32)

    x = act_ref[...]                         # (tm, Dp) f32
    xb = x.astype(jnp.bfloat16)              # bf16 MXU operands, f32 accumulation

    # base fc1 + activation
    # TODO(synk): ResidualMLP base class not provided; ReLU assumed as its activation.
    h = jnp.dot(xb, w1_ref[...], preferred_element_type=jnp.float32) + b1_ref[l]
    h = jnp.maximum(h, 0.0)

    # fc1 LoRA adapter (dropout p=0.0 -> identity). `scale` is pre-folded into
    # bb1; the rank-r intermediate never leaves vregs/VMEM.
    u = jnp.dot(xb, a1_ref[l], preferred_element_type=jnp.float32)      # (tm, r)
    h = h + jnp.dot(u, bb1_ref[l], preferred_element_type=jnp.float32)  # (tm, Hp)

    # base fc2 (fc2 LoRA exactly pre-merged into w2 = W2 + scale*A2@B2)
    y = jnp.dot(h.astype(jnp.bfloat16), w2_ref[...],
                preferred_element_type=jnp.float32) + b2_ref[l]

    # MLPLoraWrapper output + outer residual of ResidualMLPLoraWrapper
    new_act = y + x
    act_ref[...] = new_act

    @pl.when(l == pl.num_programs(1) - 1)
    def _():
        o_ref[...] = new_act.astype(o_ref.dtype)


# -----------------------------------------------------------------------------
# One-time weight preparation (hoisted out of the forward pass).
# -----------------------------------------------------------------------------
def prepare_params(params, *, lane=128):
    """Stack per-layer weights, exactly merge the fc2 LoRA into W2, fold the
    LoRA scale into B1, zero-pad D/H to multiples of 128, cast streamed
    weights to bf16 (accumulation stays f32 in the kernel)."""
    scale = float(params[0]["scale"])
    D, H = params[0]["w1"].shape
    r = params[0]["a1"].shape[1]
    Dp, Hp = _round_up(D, lane), _round_up(H, lane)

    def pad2(a, s0, s1):
        return jnp.pad(a, ((0, s0 - a.shape[0]), (0, s1 - a.shape[1])))

    w1s, w2s, b1s, b2s, a1s, bb1s = [], [], [], [], [], []
    for p in params:
        w1s.append(pad2(p["w1"], Dp, Hp))
        b1s.append(pad2(p["b1"], 1, Hp))
        w2_eff = p["w2"] + scale * (p["a2"] @ p["bb2"])       # exact linear merge
        w2s.append(pad2(w2_eff, Hp, Dp))
        b2s.append(pad2(p["b2"], 1, Dp))
        a1s.append(pad2(p["a1"], Dp, r))
        bb1s.append(pad2(scale * p["bb1"], r, Hp))            # scale folded in

    return dict(
        w1=jnp.stack(w1s).astype(jnp.bfloat16),     # (L, Dp, Hp)  streamed
        w2=jnp.stack(w2s).astype(jnp.bfloat16),     # (L, Hp, Dp)  streamed
        b1=jnp.stack(b1s).astype(jnp.float32),      # (L, 1, Hp)   resident
        b2=jnp.stack(b2s).astype(jnp.float32),      # (L, 1, Dp)   resident
        a1=jnp.stack(a1s).astype(jnp.bfloat16),     # (L, Dp, r)   resident
        bb1=jnp.stack(bb1s).astype(jnp.float32),    # (L, r, Hp)   resident
    )


# -----------------------------------------------------------------------------
# Forward: x [batch, seq, dim] -> [batch, seq, dim], single fused pallas_call.
# -----------------------------------------------------------------------------
def residual_mlp_lora_forward(x, prep, *, token_tile=512):
    B, S, D = x.shape
    M = B * S
    w1, w2 = prep["w1"], prep["w2"]
    b1, b2 = prep["b1"], prep["b2"]
    a1, bb1 = prep["a1"], prep["bb1"]
    L, Dp, Hp = w1.shape
    r = a1.shape[-1]

    xf = x.reshape(M, D).astype(jnp.float32)
    if Dp != D:
        xf = jnp.pad(xf, ((0, 0), (0, Dp - D)))
    # Token tile: multiple of 8 sublanes, capped at token_tile rows
    # (~256 on v5e, 512-1024 on v6e, 384-512 on v7x for realistic D, H).
    tm = min(token_tile, _round_up(M, 8))
    m_pad = _round_up(M, tm)
    if m_pad != M:
        xf = jnp.pad(xf, ((0, m_pad - M), (0, 0)))
    n_tiles = m_pad // tm

    def stream_spec(shape):
        # Per-layer block, layer dim squeezed out of the kernel Ref.
        return pl.BlockSpec((None,) + shape,
                            lambda i, l: (l,) + (0,) * len(shape))

    def resident_spec(arr):
        # Whole array lives in VMEM for the entire call; indexed with `l` in-kernel.
        return pl.BlockSpec(arr.shape, lambda i, l: (0,) * arr.ndim)

    # Advisory cost: streamed weights are re-read once per token tile.
    flops = L * m_pad * (4 * Dp * Hp + 2 * r * (Dp + Hp))
    stream_bytes = n_tiles * 2 * (int(w1.size) + int(w2.size))         # bf16
    resident_bytes = sum(int(a.size) * a.dtype.itemsize for a in (b1, b2, a1, bb1))
    bytes_accessed = stream_bytes + resident_bytes + 2 * m_pad * Dp * 4

    # Explicit VMEM budget: double-buffered bf16 weight blocks + I/O blocks +
    # resident small tensors + activation scratch/intermediates, with headroom.
    vmem_needed = (
        2 * 2 * Dp * Hp * 2          # w1 + w2 blocks, double-buffered, bf16
        + 4 * tm * Dp * 4            # x + out blocks (double-buffered)
        + tm * Dp * 4                # act scratch
        + 2 * tm * Hp * 4            # h / LoRA intermediates headroom
        + L * 8 * (Hp + Dp) * 4      # biases (sublane-padded layout)
        + L * Dp * 128 * 2           # a1 (lane-padded to 128)
        + L * 8 * Hp * 4             # bb1 (scale folded)
    )
    vmem_limit = int(min(max(2 * vmem_needed, 32 << 20), 100 << 20))

    out = pl.pallas_call(
        _fused_layers_kernel,
        out_shape=jax.ShapeDtypeStruct((m_pad, Dp), x.dtype),
        grid_spec=pltpu.PrefetchScalarGridSpec(
            num_scalar_prefetch=0,
            grid=(n_tiles, L),
            in_specs=[
                pl.BlockSpec((tm, Dp), lambda i, l: (i, 0)),  # x token tile
                stream_spec((Dp, Hp)),                        # w1[l]  (bf16, streamed)
                stream_spec((Hp, Dp)),                        # w2[l]  (bf16, LoRA merged)
                resident_spec(b1),                            # b1     (f32, resident)
                resident_spec(b2),                            # b2     (f32, resident)
                resident_spec(a1),                            # a1     (bf16, resident)
                resident_spec(bb1),                           # scale*bb1 (f32, resident)
            ],
            out_specs=pl.BlockSpec((tm, Dp), lambda i, l: (i, 0)),
            scratch_shapes=[pltpu.VMEM((tm, Dp), jnp.float32)],
        ),
        compiler_params=pltpu.CompilerParams(
            dimension_semantics=("parallel", "arbitrary"),
            vmem_limit_bytes=vmem_limit),
        cost_estimate=pl.CostEstimate(flops=flops, transcendentals=0,
                                      bytes_accessed=bytes_accessed),
    )(xf, w1, w2, b1, b2, a1, bb1)

    # TODO(synk): for v7x (64 MiB VMEM/TC) with very large D*H, add a hidden-dim
    # grid axis accumulating y += h_k @ W2[k] into a (tm, Dp) scratch.
    return out[:M, :D].reshape(B, S, D)


# -----------------------------------------------------------------------------
# Parameter init mirroring the PyTorch module __init__ (weights stored [in,out]).
# -----------------------------------------------------------------------------
def init_params(key, dim, hidden_dim, num_layers, adapter_dim=8, alpha=32):
    scale = alpha / adapter_dim
    params = []
    for _ in range(num_layers):
        key, *ks = jax.random.split(key, 7)
        bound_d = 1.0 / (dim ** 0.5)
        bound_h = 1.0 / (hidden_dim ** 0.5)
        # base MLP: fc1 (dim->hidden), fc2 (hidden->dim), nn.Linear default init
        w1 = jax.random.uniform(ks[0], (dim, hidden_dim), jnp.float32, -bound_d, bound_d)
        b1 = jax.random.uniform(ks[1], (1, hidden_dim), jnp.float32, -bound_d, bound_d)
        w2 = jax.random.uniform(ks[2], (hidden_dim, dim), jnp.float32, -bound_h, bound_h)
        b2 = jax.random.uniform(ks[3], (1, dim), jnp.float32, -bound_h, bound_h)
        # LoRA: lora_a kaiming_uniform(a=sqrt(5)) -> U(+/-1/sqrt(fan_in)); lora_b zeros, no bias.
        a1 = jax.random.uniform(ks[4], (dim, adapter_dim), jnp.float32, -bound_d, bound_d)
        bb1 = jnp.zeros((adapter_dim, hidden_dim), jnp.float32)
        a2 = jax.random.uniform(ks[5], (hidden_dim, adapter_dim), jnp.float32, -bound_h, bound_h)
        bb2 = jnp.zeros((adapter_dim, dim), jnp.float32)
        params.append(dict(w1=w1, b1=b1, w2=w2, b2=b2,
                           a1=a1, bb1=bb1, a2=a2, bb2=bb2, scale=scale))
    return params


# -----------------------------------------------------------------------------
# References for correctness checks.
# -----------------------------------------------------------------------------
def _reference_forward_prepared(x, prep):
    """Mirrors the kernel's prepared weights and bf16 operand casts."""
    B, S, D = x.shape
    L, Dp, _ = prep["w1"].shape
    f32 = jnp.float32
    out = jnp.pad(x.reshape(B * S, D).astype(f32), ((0, 0), (0, Dp - D)))
    for l in range(L):
        xin = out
        xb = xin.astype(jnp.bfloat16).astype(f32)
        w1 = prep["w1"][l].astype(f32)
        w2 = prep["w2"][l].astype(f32)
        a1 = prep["a1"][l].astype(f32)
        h = jnp.maximum(xb @ w1 + prep["b1"][l], 0.0)
        h = h + (xb @ a1) @ prep["bb1"][l]
        y = h.astype(jnp.bfloat16).astype(f32) @ w2 + prep["b2"][l]
        out = y + xin
    return out[:, :D].reshape(B, S, D)


def _reference_forward_f32(x, params):
    """Pure-f32 reference of the original module semantics (no merge/fold)."""
    B, S, D = x.shape
    out = x.reshape(B * S, D)
    for p in params:
        xin = out
        h = jnp.maximum(xin @ p["w1"] + p["b1"], 0.0)
        h = h + (xin @ p["a1"]) @ p["bb1"] * p["scale"]
        y = h @ p["w2"] + p["b2"]
        y = y + (h @ p["a2"]) @ p["bb2"] * p["scale"]
        out = y + xin
    return out.reshape(B, S, D)


if __name__ == "__main__":
    batch, seq, dim, hidden_dim = 2, 8, 32, 64
    num_layers, adapter_dim, alpha = 3, 8, 32

    key = jax.random.PRNGKey(0)
    key_x, key_p, key_t = jax.random.split(key, 3)
    x = jax.random.normal(key_x, (batch, seq, dim), jnp.float32)
    params = init_params(key_p, dim, hidden_dim, num_layers, adapter_dim, alpha)

    # Module init zeros lora_b, which would make the adapter path numerically
    # inert; randomize it here (test only) so the LoRA branch is exercised.
    for p in params:
        k1, k2, key_t = jax.random.split(key_t, 3)
        p["bb1"] = 0.05 * jax.random.normal(k1, p["bb1"].shape, jnp.float32)
        p["bb2"] = 0.05 * jax.random.normal(k2, p["bb2"].shape, jnp.float32)

    # One-time weight prep (merge fc2 LoRA, fold scale, pad to 128, bf16 cast).
    prep = prepare_params(params)

    out = jax.jit(residual_mlp_lora_forward)(x, prep)
    out = jax.block_until_ready(out)
    assert out.shape == (batch, seq, dim)

    ref_prep = _reference_forward_prepared(x, prep)
    assert jnp.allclose(out, ref_prep, atol=1e-2, rtol=1e-2), \
        "mismatch vs prepared-weight (bf16-emulating) reference"

    ref_f32 = _reference_forward_f32(x, params)
    assert jnp.allclose(out, ref_f32, atol=5e-2, rtol=5e-2), \
        "mismatch vs pure-f32 module reference"

    print("KERNEL_OK")
</pallas_src>

<mosaic_0001>
module attributes {stable_mosaic.version = 11 : i64} {
  func.func @_fused_layers_kernel(%arg0: i32, %arg1: i32, %arg2: memref<16x128xf32, #tpu.memory_space<vmem>>, %arg3: memref<1x128x128xbf16, #tpu.memory_space<vmem>>, %arg4: memref<1x128x128xbf16, #tpu.memory_space<vmem>>, %arg5: memref<3x1x128xf32, #tpu.memory_space<vmem>>, %arg6: memref<3x1x128xf32, #tpu.memory_space<vmem>>, %arg7: memref<3x128x8xbf16, #tpu.memory_space<vmem>>, %arg8: memref<3x8x128xf32, #tpu.memory_space<vmem>>, %arg9: memref<16x128xf32, #tpu.memory_space<vmem>>, %arg10: memref<16x128xf32, #tpu.memory_space<vmem>>) attributes {dimension_semantics = [#tpu.dimension_semantics<parallel>, #tpu.dimension_semantics<arbitrary>], iteration_bounds = array<i64: 1, 3>, scalar_prefetch = 0 : i64, scratch_operands = 1 : i64, tpu.core_type = #tpu.core_type<tc>, window_params = [{transform_indices = @transform_0, window_bounds = array<i64: 16, 128>}, {transform_indices = @transform_1, window_bounds = array<i64: 1, 128, 128>}, {transform_indices = @transform_2, window_bounds = array<i64: 1, 128, 128>}, {pipeline_mode = #tpu.pipeline_mode<synchronous>, transform_indices = @transform_3, window_bounds = array<i64: 3, 1, 128>}, {pipeline_mode = #tpu.pipeline_mode<synchronous>, transform_indices = @transform_4, window_bounds = array<i64: 3, 1, 128>}, {pipeline_mode = #tpu.pipeline_mode<synchronous>, transform_indices = @transform_5, window_bounds = array<i64: 3, 128, 8>}, {pipeline_mode = #tpu.pipeline_mode<synchronous>, transform_indices = @transform_6, window_bounds = array<i64: 3, 8, 128>}, {transform_indices = @transform_7, window_bounds = array<i64: 16, 128>}]} {
    %c0_i32 = arith.constant 0 : i32
    %0 = arith.cmpi eq, %arg1, %c0_i32 : i32
    %1 = arith.extui %0 : i1 to i32
    %c0_i32_0 = arith.constant 0 : i32
    %2 = arith.cmpi ne, %1, %c0_i32_0 : i32
    scf.if %2 {
      %c0_23 = arith.constant 0 : index
      %c0_24 = arith.constant 0 : index
      %38 = vector.load %arg2[%c0_23, %c0_24] : memref<16x128xf32, #tpu.memory_space<vmem>>, vector<16x128xf32>
      %c0_25 = arith.constant 0 : index
      %c0_26 = arith.constant 0 : index
      %39 = vector.load %arg10[%c0_25, %c0_26] : memref<16x128xf32, #tpu.memory_space<vmem>>, vector<16x128xf32>
      tpu.vector_store %arg10[%c0_25, %c0_26], %38 {strides = array<i32>} : memref<16x128xf32, #tpu.memory_space<vmem>>, vector<16x128xf32>,
    } else {
    }
    %c0 = arith.constant 0 : index
    %c0_1 = arith.constant 0 : index
    %3 = vector.load %arg10[%c0, %c0_1] : memref<16x128xf32, #tpu.memory_space<vmem>>, vector<16x128xf32>
    %4 = arith.truncf %3 : vector<16x128xf32> to vector<16x128xbf16>
    %c0_2 = arith.constant 0 : index
    %c0_3 = arith.constant 0 : index
    %c0_4 = arith.constant 0 : index
    %5 = vector.load %arg3[%c0_2, %c0_3, %c0_4] : memref<1x128x128xbf16, #tpu.memory_space<vmem>>, vector<1x128x128xbf16>
    %6 = vector.shape_cast %5 : vector<1x128x128xbf16> to vector<128x128xbf16>
    %cst = arith.constant dense<0.000000e+00> : vector<16x128xf32>
    %7 = tpu.matmul %4, %6, %cst {dimension_numbers = #tpu.dot_dimension_numbers<[1], [0], [0], [1], [0, 0, 1, 1], [], []>} : vector<16x128xbf16>, vector<128x128xbf16>, vector<16x128xf32> -> vector<16x128xf32>
    %8 = arith.index_cast %arg1 : i32 to index
    %c0_5 = arith.constant 0 : index
    %c0_6 = arith.constant 0 : index
    %9 = vector.load %arg5[%8, %c0_5, %c0_6] : memref<3x1x128xf32, #tpu.memory_space<vmem>>, vector<1x1x128xf32>
    %10 = vector.shape_cast %9 : vector<1x1x128xf32> to vector<1x128xf32>
    %11 = vector.broadcast %10 : vector<1x128xf32> to vector<16x128xf32>
    %12 = arith.addf %7, %11 : vector<16x128xf32>
    %cst_7 = arith.constant 0.000000e+00 : f32
    %13 = vector.broadcast %cst_7 : f32 to vector<16x128xf32>
    %14 = arith.maximumf %12, %13 : vector<16x128xf32>
    %15 = arith.index_cast %arg1 : i32 to index
    %c0_8 = arith.constant 0 : index
    %c0_9 = arith.constant 0 : index
    %16 = vector.load %arg7[%15, %c0_8, %c0_9] : memref<3x128x8xbf16, #tpu.memory_space<vmem>>, vector<1x128x8xbf16>
    %17 = vector.shape_cast %16 : vector<1x128x8xbf16> to vector<128x8xbf16>
    %cst_10 = arith.constant dense<0.000000e+00> : vector<16x8xf32>
    %18 = tpu.matmul %4, %17, %cst_10 {dimension_numbers = #tpu.dot_dimension_numbers<[1], [0], [0], [1], [0, 0, 1, 1], [], []>} : vector<16x128xbf16>, vector<128x8xbf16>, vector<16x8xf32> -> vector<16x8xf32>
    %19 = arith.index_cast %arg1 : i32 to index
    %c0_11 = arith.constant 0 : index
    %c0_12 = arith.constant 0 : index
    %20 = vector.load %arg8[%19, %c0_11, %c0_12] : memref<3x8x128xf32, #tpu.memory_space<vmem>>, vector<1x8x128xf32>
    %21 = vector.shape_cast %20 : vector<1x8x128xf32> to vector<8x128xf32>
    %cst_13 = arith.constant dense<0.000000e+00> : vector<16x128xf32>
    %22 = tpu.matmul %18, %21, %cst_13 {dimension_numbers = #tpu.dot_dimension_numbers<[1], [0], [0], [1], [0, 0, 1, 1], [], []>} : vector<16x8xf32>, vector<8x128xf32>, vector<16x128xf32> -> vector<16x128xf32>
    %23 = arith.addf %14, %22 : vector<16x128xf32>
    %24 = arith.truncf %23 : vector<16x128xf32> to vector<16x128xbf16>
    %c0_14 = arith.constant 0 : index
    %c0_15 = arith.constant 0 : index
    %c0_16 = arith.constant 0 : index
    %25 = vector.load %arg4[%c0_14, %c0_15, %c0_16] : memref<1x128x128xbf16, #tpu.memory_space<vmem>>, vector<1x128x128xbf16>
    %26 = vector.shape_cast %25 : vector<1x128x128xbf16> to vector<128x128xbf16>
    %cst_17 = arith.constant dense<0.000000e+00> : vector<16x128xf32>
    %27 = tpu.matmul %24, %26, %cst_17 {dimension_numbers = #tpu.dot_dimension_numbers<[1], [0], [0], [1], [0, 0, 1, 1], [], []>} : vector<16x128xbf16>, vector<128x128xbf16>, vector<16x128xf32> -> vector<16x128xf32>
    %28 = arith.index_cast %arg1 : i32 to index
    %c0_18 = arith.constant 0 : index
    %c0_19 = arith.constant 0 : index
    %29 = vector.load %arg6[%28, %c0_18, %c0_19] : memref<3x1x128xf32, #tpu.memory_space<vmem>>, vector<1x1x128xf32>
    %30 = vector.shape_cast %29 : vector<1x1x128xf32> to vector<1x128xf32>
    %31 = vector.broadcast %30 : vector<1x128xf32> to vector<16x128xf32>
    %32 = arith.addf %27, %31 : vector<16x128xf32>
    %33 = arith.addf %32, %3 : vector<16x128xf32>
    %c0_20 = arith.constant 0 : index
    %c0_21 = arith.constant 0 : index
    %34 = vector.load %arg10[%c0_20, %c0_21] : memref<16x128xf32, #tpu.memory_space<vmem>>, vector<16x128xf32>
    tpu.vector_store %arg10[%c0_20, %c0_21], %33 {strides = array<i32>} : memref<16x128xf32, #tpu.memory_space<vmem>>, vector<16x128xf32>,
    %c2_i32 = arith.constant 2 : i32
    %35 = arith.cmpi eq, %arg1, %c2_i32 : i32
    %36 = arith.extui %35 : i1 to i32
    %c0_i32_22 = arith.constant 0 : i32
    %37 = arith.cmpi ne, %36, %c0_i32_22 : i32
    scf.if %37 {
      %c0_23 = arith.constant 0 : index
      %c0_24 = arith.constant 0 : index
      %38 = vector.load %arg9[%c0_23, %c0_24] : memref<16x128xf32, #tpu.memory_space<vmem>>, vector<16x128xf32>
      tpu.vector_store %arg9[%c0_23, %c0_24], %33 {strides = array<i32>} : memref<16x128xf32, #tpu.memory_space<vmem>>, vector<16x128xf32>,
    } else {
    }
    return
  }
  func.func @transform_0(%arg0: i32, %arg1: i32) -> (i32, i32) {
    %c0_i32 = arith.constant 0 : i32
    %c0_i32_0 = arith.constant 0 : i32
    return %arg0, %c0_i32 : i32, i32
  }
  func.func @transform_1(%arg0: i32, %arg1: i32) -> (i32, i32, i32) {
    %c0_i32 = arith.constant 0 : i32
    %c0_i32_0 = arith.constant 0 : i32
    %c0_i32_1 = arith.constant 0 : i32
    return %arg1, %c0_i32, %c0_i32_0 : i32, i32, i32
  }
  func.func @transform_2(%arg0: i32, %arg1: i32) -> (i32, i32, i32) {
    %c0_i32 = arith.constant 0 : i32
    %c0_i32_0 = arith.constant 0 : i32
    %c0_i32_1 = arith.constant 0 : i32
    return %arg1, %c0_i32, %c0_i32_0 : i32, i32, i32
  }
  func.func @transform_3(%arg0: i32, %arg1: i32) -> (i32, i32, i32) {
    %c0_i32 = arith.constant 0 : i32
    %c0_i32_0 = arith.constant 0 : i32
    %c0_i32_1 = arith.constant 0 : i32
    %c0_i32_2 = arith.constant 0 : i32
    return %c0_i32, %c0_i32_0, %c0_i32_1 : i32, i32, i32
  }
  func.func @transform_4(%arg0: i32, %arg1: i32) -> (i32, i32, i32) {
    %c0_i32 = arith.constant 0 : i32
    %c0_i32_0 = arith.constant 0 : i32
    %c0_i32_1 = arith.constant 0 : i32
    %c0_i32_2 = arith.constant 0 : i32
    return %c0_i32, %c0_i32_0, %c0_i32_1 : i32, i32, i32
  }
  func.func @transform_5(%arg0: i32, %arg1: i32) -> (i32, i32, i32) {
    %c0_i32 = arith.constant 0 : i32
    %c0_i32_0 = arith.constant 0 : i32
    %c0_i32_1 = arith.constant 0 : i32
    %c0_i32_2 = arith.constant 0 : i32
    return %c0_i32, %c0_i32_0, %c0_i32_1 : i32, i32, i32
  }
  func.func @transform_6(%arg0: i32, %arg1: i32) -> (i32, i32, i32) {
    %c0_i32 = arith.constant 0 : i32
    %c0_i32_0 = arith.constant 0 : i32
    %c0_i32_1 = arith.constant 0 : i32
    %c0_i32_2 = arith.constant 0 : i32
    return %c0_i32, %c0_i32_0, %c0_i32_1 : i32, i32, i32
  }
  func.func @transform_7(%arg0: i32, %arg1: i32) -> (i32, i32) {
    %c0_i32 = arith.constant 0 : i32
    %c0_i32_0 = arith.constant 0 : i32
    return %arg0, %c0_i32 : i32, i32
  }
}

</mosaic_0001>

<llo_original>
// kernel: residual_mlp_lora_forward.1
$region0: #{residual_mlp_lora_forward.1}
  #allocation0 [shape = 'u32[]', space=smem, size = 0x4, offset = 0x4, fixed_abs, tag = 'smem constant byte address 0x4 - core index']
  #allocation1 [shape = 'u32[72,128]{1,0:T(1,128)}', space=vmem, size = 0x9000, scoped, tag = 'internal scratch']
  #allocation2 [shape = 'f32[16,128]{1,0:T(8,128)}', space=vmem, size = 0x2000, scoped, tag = 'scratch operand']
  %s0 = inlined_call_operand.vmem [shape: f32[16,128], index: 0, kind: input, shape index: {}]
  %s1 = inlined_call_operand.vmem [shape: bf16[3,128,128], index: 1, kind: input, shape index: {}]
  %s2 = inlined_call_operand.hbm [shape: bf16[3,128,128], index: 2, kind: input, shape index: {}]
  %s3 = inlined_call_operand.vmem [shape: f32[3,1,128], index: 3, kind: input, shape index: {}]
  %s4 = inlined_call_operand.vmem [shape: f32[3,1,128], index: 4, kind: input, shape index: {}]
  %s5 = inlined_call_operand.vmem [shape: bf16[3,128,8], index: 5, kind: input, shape index: {}]
  %s6 = inlined_call_operand.vmem [shape: f32[3,8,128], index: 6, kind: input, shape index: {}]
  %s7 = inlined_call_operand.vmem [shape: f32[16,128], index: 7, kind: output, shape index: {}]
  %s8 = sld [smem:[#allocation0]]
  $region73: #{residual_mlp_lora_forward.1} parent=0
    _
  %s10 = ssub.s32 1, %s8
  %s11 = scalar_select 0, %s10, %s8
  $region1: #{residual_mlp_lora_forward.1} parent=0
    #allocation3 [shape = 'u8[65536]{0}', space=vmem, size = 0x10000, scoped, tag = 'input window, operand 2']
    #allocation4 [shape = 's32[2]{0}', space=sflag, size = 0x8, scoped, tag = 'scoped memory for residual_mlp_lora_forward.1']
    %12 = vsyncpa [#allocation4], 0
    %s13 = scalar_lea.sflag [#allocation4], 1
    %14 = vsyncpa %s13, 0
    loop: start=0, step=1, limit=5
    $region2: #{residual_mlp_lora_forward.1} parent=1 // loop_pre_header
      _
    $region3: #{residual_mlp_lora_forward.1} parent=1 // loop_header
      %s16 = sphi 0, %s20
      %p17 = scmp.ge.s32.totalorder %s16, 5
      %s23 = sphi 0, %s35
      %s24 = sphi 0, %s31
      %s25 = sphi 0, %s23
      %s26 = sphi 0, %s24
      %s27 = sphi 0, %s25
      %s28 = sphi 0, %s26
      %s38 = sphi 0, %s40
      %s41 = sphi 0, %s38
      %s42 = sphi 0, %s41
      %s58 = sphi 0, %s42
      %s64 = sphi 0, %s66
      %s67 = sphi 0, %s64
      %s68 = sphi 0, %s67
      %s84 = sphi 0, %s68
      %s90 = sphi 0, %s92
      %s93 = sphi 0, %s90
      %s94 = sphi 0, %s93
      %s110 = sphi 0, %s94
      %s114 = sphi 0, %s114
      %s116 = sphi 0, %s114
      %s117 = sphi 0, %s116
      %s131 = sphi 0, %s117
      %s135 = sphi 0, %s135
      %s137 = sphi 0, %s135
      %s138 = sphi 0, %s137
      %s152 = sphi 0, %s138
      %s156 = sphi 0, %s156
      %s158 = sphi 0, %s156
      %s159 = sphi 0, %s158
      %s173 = sphi 0, %s159
      %s177 = sphi 0, %s177
      %s179 = sphi 0, %s177
      %s180 = sphi 0, %s179
      %s194 = sphi 0, %s180
      %s200 = sphi 0, %s202
      %s203 = sphi 0, %s200
      %s204 = sphi 0, %s203
      %s220 = sphi 0, %s204
    $region4: #{residual_mlp_lora_forward.1} parent=1 // loop_header_branch
      %19 = sbr.rel (%p17) target = $region8
    $region5: #{residual_mlp_lora_forward.1} parent=1 // loop_body
      %s21 = ssub.s32 %s16, 1
      %s22 = ssub.s32 %s16, 2
      %s29 = sadd.s32 1, %s24
      %p30 = scmp.ge.s32.totalorder %s29, 3
      %s31 = scalar_select %p30, 0, %s29
      %s32 = sadd.s32 1, %s23
      %s33 = scalar_select %p30, %s32, %s23
      %p34 = scmp.ge.s32.totalorder %s33, 1
      %s35 = scalar_select %p34, 0, %s33
      %s36 = ssub.s32 %s23, %s35
      %p37 = scmp.eq.s32.totalorder %s36, 0
      %s39 = sadd.s32 %s38, 1
      %s40 = scalar_select %p37, %s38, %s39
      %p43 = pneg %p37
      %p44 = scmp.eq.s32.totalorder %s16, 2
      %p45 = por %p43, %p44
      %p46 = scmp.ne.s32.totalorder %s38, %s41
      %p47 = scmp.eq.s32.totalorder %s16, 0
      %p48 = por %p46, %p47
      %p49 = scmp.ne.s32.totalorder %s38, %s41
      %p50 = scmp.eq.s32.totalorder %s21, 2
      %p51 = por %p49, %p50
      %p52 = scmp.ne.s32.totalorder %s41, %s42
      %p53 = scmp.eq.s32.totalorder %s21, 0
      %p54 = por %p52, %p53
      %p55 = scmp.ne.s32.totalorder %s41, %s42
      %p56 = scmp.eq.s32.totalorder %s22, 2
      %p57 = por %p55, %p56
      %p59 = scmp.ne.s32.totalorder %s42, %s58
      %p60 = scmp.eq.s32.totalorder %s22, 0
      %p61 = por %p59, %p60
      %s62 = ssub.s32 %s24, %s31
      %p63 = scmp.eq.s32.totalorder %s62, 0
      %s65 = sadd.s32 %s64, 1
      %s66 = scalar_select %p63, %s64, %s65
      %p69 = pneg %p63
      %p70 = scmp.eq.s32.totalorder %s16, 2
      %p71 = por %p69, %p70
      %p72 = scmp.ne.s32.totalorder %s64, %s67
      %p73 = scmp.eq.s32.totalorder %s16, 0
      %p74 = por %p72, %p73
      %p75 = scmp.ne.s32.totalorder %s64, %s67
      %p76 = scmp.eq.s32.totalorder %s21, 2
      %p77 = por %p75, %p76
      %p78 = scmp.ne.s32.totalorder %s67, %s68
      %p79 = scmp.eq.s32.totalorder %s21, 0
      %p80 = por %p78, %p79
      %p81 = scmp.ne.s32.totalorder %s67, %s68
      %p82 = scmp.eq.s32.totalorder %s22, 2
      %p83 = por %p81, %p82
      %p85 = scmp.ne.s32.totalorder %s68, %s84
      %p86 = scmp.eq.s32.totalorder %s22, 0
      %p87 = por %p85, %p86
      %s88 = ssub.s32 %s24, %s31
      %p89 = scmp.eq.s32.totalorder %s88, 0
      %s91 = sadd.s32 %s90, 1
      %s92 = scalar_select %p89, %s90, %s91
      %p95 = pneg %p89
      %p96 = scmp.eq.s32.totalorder %s16, 2
      %p97 = por %p95, %p96
      %p98 = scmp.ne.s32.totalorder %s90, %s93
      %p99 = scmp.eq.s32.totalorder %s16, 0
      %p100 = por %p98, %p99
      %p101 = scmp.ne.s32.totalorder %s90, %s93
      %p102 = scmp.eq.s32.totalorder %s21, 2
      %p103 = por %p101, %p102
      %p104 = scmp.ne.s32.totalorder %s93, %s94
      %p105 = scmp.eq.s32.totalorder %s21, 0
      %p106 = por %p104, %p105
      %p107 = scmp.ne.s32.totalorder %s93, %s94
      %p108 = scmp.eq.s32.totalorder %s22, 2
      %p109 = por %p107, %p108
      %p111 = scmp.ne.s32.totalorder %s94, %s110
      %p112 = scmp.eq.s32.totalorder %s22, 0
      %p113 = por %p111, %p112
      %s115 = sadd.s32 %s114, 1
      %p118 = scmp.eq.s32.totalorder %s16, 2
      %p119 = scmp.ne.s32.totalorder %s114, %s116
      %p120 = scmp.eq.s32.totalorder %s16, 0
      %p121 = por %p119, %p120
      %p122 = scmp.ne.s32.totalorder %s114, %s116
      %p123 = scmp.eq.s32.totalorder %s21, 2
      %p124 = por %p122, %p123
      %p125 = scmp.ne.s32.totalorder %s116, %s117
      %p126 = scmp.eq.s32.totalorder %s21, 0
      %p127 = por %p125, %p126
      %p128 = scmp.ne.s32.totalorder %s116, %s117
      %p129 = scmp.eq.s32.totalorder %s22, 2
      %p130 = por %p128, %p129
      %p132 = scmp.ne.s32.totalorder %s117, %s131
      %p133 = scmp.eq.s32.totalorder %s22, 0
      %p134 = por %p132, %p133
      %s136 = sadd.s32 %s135, 1
      %p139 = scmp.eq.s32.totalorder %s16, 2
      %p140 = scmp.ne.s32.totalorder %s135, %s137
      %p141 = scmp.eq.s32.totalorder %s16, 0
      %p142 = por %p140, %p141
      %p143 = scmp.ne.s32.totalorder %s135, %s137
      %p144 = scmp.eq.s32.totalorder %s21, 2
      %p145 = por %p143, %p144
      %p146 = scmp.ne.s32.totalorder %s137, %s138
      %p147 = scmp.eq.s32.totalorder %s21, 0
      %p148 = por %p146, %p147
      %p149 = scmp.ne.s32.totalorder %s137, %s138
      %p150 = scmp.eq.s32.totalorder %s22, 2
      %p151 = por %p149, %p150
      %p153 = scmp.ne.s32.totalorder %s138, %s152
      %p154 = scmp.eq.s32.totalorder %s22, 0
      %p155 = por %p153, %p154
      %s157 = sadd.s32 %s156, 1
      %p160 = scmp.eq.s32.totalorder %s16, 2
      %p161 = scmp.ne.s32.totalorder %s156, %s158
      %p162 = scmp.eq.s32.totalorder %s16, 0
      %p163 = por %p161, %p162
      %p164 = scmp.ne.s32.totalorder %s156, %s158
      %p165 = scmp.eq.s32.totalorder %s21, 2
      %p166 = por %p164, %p165
      %p167 = scmp.ne.s32.totalorder %s158, %s159
      %p168 = scmp.eq.s32.totalorder %s21, 0
      %p169 = por %p167, %p168
      %p170 = scmp.ne.s32.totalorder %s158, %s159
      %p171 = scmp.eq.s32.totalorder %s22, 2
      %p172 = por %p170, %p171
      %p174 = scmp.ne.s32.totalorder %s159, %s173
      %p175 = scmp.eq.s32.totalorder %s22, 0
      %p176 = por %p174, %p175
      %s178 = sadd.s32 %s177, 1
      %p181 = scmp.eq.s32.totalorder %s16, 2
      %p182 = scmp.ne.s32.totalorder %s177, %s179
      %p183 = scmp.eq.s32.totalorder %s16, 0
      %p184 = por %p182, %p183
      %p185 = scmp.ne.s32.totalorder %s177, %s179
      %p186 = scmp.eq.s32.totalorder %s21, 2
      %p187 = por %p185, %p186
      %p188 = scmp.ne.s32.totalorder %s179, %s180
      %p189 = scmp.eq.s32.totalorder %s21, 0
      %p190 = por %p188, %p189
      %p191 = scmp.ne.s32.totalorder %s179, %s180
      %p192 = scmp.eq.s32.totalorder %s22, 2
      %p193 = por %p191, %p192
      %p195 = scmp.ne.s32.totalorder %s180, %s194
      %p196 = scmp.eq.s32.totalorder %s22, 0
      %p197 = por %p195, %p196
      %s198 = ssub.s32 %s23, %s35
      %p199 = scmp.eq.s32.totalorder %s198, 0
      %s201 = sadd.s32 %s200, 1
      %s202 = scalar_select %p199, %s200, %s201
      %p205 = pneg %p199
      %p206 = scmp.eq.s32.totalorder %s16, 2
      %p207 = por %p205, %p206
      %p208 = scmp.ne.s32.totalorder %s200, %s203
      %p209 = scmp.eq.s32.totalorder %s16, 0
      %p210 = por %p208, %p209
      %p211 = scmp.ne.s32.totalorder %s200, %s203
      %p212 = scmp.eq.s32.totalorder %s21, 2
      %p213 = por %p211, %p212
      %p214 = scmp.ne.s32.totalorder %s203, %s204
      %p215 = scmp.eq.s32.totalorder %s21, 0
      %p216 = por %p214, %p215
      %p217 = scmp.ne.s32.totalorder %s203, %s204
      %p218 = scmp.eq.s32.totalorder %s22, 2
      %p219 = por %p217, %p218
      %p221 = scmp.ne.s32.totalorder %s204, %s220
      %p222 = scmp.eq.s32.totalorder %s22, 0
      %p223 = por %p221, %p222
      %p224 = scmp.le.s32.totalorder 1, %s16
      %p225 = scmp.lt.s32.totalorder %s16, 4
      %p226 = pnand %p224, %p225
      %p227 = pneg %p226
      // Predicated region
      $region9: #{residual_mlp_lora_forward.1} parent=5 // pred_check
        _
      $region10: #{residual_mlp_lora_forward.1} parent=5 // pred_check_branch
        %229 = sbr.rel (%p226) target = $region12
      $region11: #{residual_mlp_lora_forward.1} parent=5 // pred_region
        %s230 = ssub.s32 %s16, 1
        // Predicated region
        $region13: #{residual_mlp_lora_forward.1} parent=11 // pred_check
          %p231 = pneg %p54
        $region14: #{residual_mlp_lora_forward.1} parent=11 // pred_check_branch
          %233 = sbr.rel (%p231) target = $region16
        $region15: #{residual_mlp_lora_forward.1} parent=11 // pred_region
          %s234 = smul.u32 2, %s25
          %p235 = scmp.lt.s32.totalorder %s234, 1
          %s236 = scalar_select %p235, %s234, 1
          %s237 = smul.addr %s236, 8
          %s238 = scalar_lea.vmem %s0, %s237
          %s239 = smul.u32 2, %s25
        $region16: #{residual_mlp_lora_forward.1} parent=11 // pred_fallthru
          _
        // Predicated region
        $region17: #{residual_mlp_lora_forward.1} parent=11 // pred_check
          %p240 = pneg %p127
        $region18: #{residual_mlp_lora_forward.1} parent=11 // pred_check_branch
          %242 = sbr.rel (%p240) target = $region20
        $region19: #{residual_mlp_lora_forward.1} parent=11 // pred_region
          _
        $region20: #{residual_mlp_lora_forward.1} parent=11 // pred_fallthru
          _
        // Predicated region
        $region21: #{residual_mlp_lora_forward.1} parent=11 // pred_check
          %p243 = pneg %p148
        $region22: #{residual_mlp_lora_forward.1} parent=11 // pred_check_branch
          %245 = sbr.rel (%p243) target = $region24
        $region23: #{residual_mlp_lora_forward.1} parent=11 // pred_region
          _
        $region24: #{residual_mlp_lora_forward.1} parent=11 // pred_fallthru
          _
        // Predicated region
        $region25: #{residual_mlp_lora_forward.1} parent=11 // pred_check
          %p246 = pneg %p169
        $region26: #{residual_mlp_lora_forward.1} parent=11 // pred_check_branch
          %248 = sbr.rel (%p246) target = $region28
        $region27: #{residual_mlp_lora_forward.1} parent=11 // pred_region
          _
        $region28: #{residual_mlp_lora_forward.1} parent=11 // pred_fallthru
          _
        // Predicated region
        $region29: #{residual_mlp_lora_forward.1} parent=11 // pred_check
          %p249 = pneg %p190
        $region30: #{residual_mlp_lora_forward.1} parent=11 // pred_check_branch
          %251 = sbr.rel (%p249) target = $region32
        $region31: #{residual_mlp_lora_forward.1} parent=11 // pred_region
          _
        $region32: #{residual_mlp_lora_forward.1} parent=11 // pred_fallthru
          _
      $region12: #{residual_mlp_lora_forward.1} parent=5 // pred_fallthru
        _
      %p252 = scmp.lt.s32.totalorder %s16, 3
      // Predicated region
      $region33: #{residual_mlp_lora_forward.1} parent=5 // pred_check
        %p253 = pneg %p252
      $region34: #{residual_mlp_lora_forward.1} parent=5 // pred_check_branch
        %255 = sbr.rel (%p253) target = $region36
      $region35: #{residual_mlp_lora_forward.1} parent=5 // pred_region
        // Predicated region
        $region37: #{residual_mlp_lora_forward.1} parent=35 // pred_check
          %p256 = pneg %p74
        $region38: #{residual_mlp_lora_forward.1} parent=35 // pred_check_branch
          %258 = sbr.rel (%p256) target = $region40
        $region39: #{residual_mlp_lora_forward.1} parent=35 // pred_region
          %p259 = scmp.lt.s32.totalorder %s24, 2
          %s260 = scalar_select %p259, %s24, 2
          %s261 = smul.addr %s260, 16
          %s262 = smul.addr %s261, 4
          %s263 = scalar_lea.vmem %s1, %s262
        $region40: #{residual_mlp_lora_forward.1} parent=35 // pred_fallthru
          _
        // Predicated region
        $region41: #{residual_mlp_lora_forward.1} parent=35 // pred_check
          %p264 = pneg %p100
        $region42: #{residual_mlp_lora_forward.1} parent=35 // pred_check_branch
          %266 = sbr.rel (%p264) target = $region44
        $region43: #{residual_mlp_lora_forward.1} parent=35 // pred_region
          %s267 = sand.u32 %s90, 1
          %s268 = scalar_lea.sflag [#allocation4], %s267
          %s269 = sand.u32 %s90, 1
          %s270 = smul.addr %s269, 64
          %s271 = scalar_lea.vmem [#allocation3], %s270
          %273 = vsyncadd %s268, 0
          %s274 = smul.addr %s24, 16
          %s275 = smul.addr %s274, 4
          %s276 = scalar_lea.hbm %s2, %s275
          %s277 = sshll.u32 %s276, 4
          %s278 = int_to_ptr.hbm [resolvable:$true] %s277
          %s279 = sshll.u32 %s271, 4
          %s280 = int_to_ptr.vmem [resolvable:$true] %s279
          %285 = dma.hbm_to_vmem [thread:$0]  %s278, 1024, %s280, %s268, 64, 64, 4
        $region44: #{residual_mlp_lora_forward.1} parent=35 // pred_fallthru
          _
      $region36: #{residual_mlp_lora_forward.1} parent=5 // pred_fallthru
        _
      %p286 = scmp.le.s32.totalorder 1, %s16
      %p287 = scmp.lt.s32.totalorder %s16, 4
      %p288 = pnand %p286, %p287
      %p289 = pneg %p288
      // Predicated region
      $region45: #{residual_mlp_lora_forward.1} parent=5 // pred_check
        _
      $region46: #{residual_mlp_lora_forward.1} parent=5 // pred_check_branch
        %291 = sbr.rel (%p288) target = $region48
      $region47: #{residual_mlp_lora_forward.1} parent=5 // pred_region
        %s292 = ssub.s32 %s16, 1
        %s293 = sand.u32 %s93, 1
        %s294 = scalar_lea.sflag [#allocation4], %s293
        %s295 = sand.u32 %s93, 1
        %s296 = smul.addr %s295, 64
        %s297 = scalar_lea.vmem [#allocation3], %s296
        // Predicated region
        $region49: #{residual_mlp_lora_forward.1} parent=47 // pred_check
          %p298 = pneg %p106
        $region50: #{residual_mlp_lora_forward.1} parent=47 // pred_check_branch
          %300 = sbr.rel (%p298) target = $region52
        $region51: #{residual_mlp_lora_forward.1} parent=47 // pred_region
          %302 = dma.done %s294, 1024
        $region52: #{residual_mlp_lora_forward.1} parent=47 // pred_fallthru
          _
        %s303 = smul.u32 2, %s25
        %p304 = scmp.lt.s32.totalorder %s303, 1
        %s305 = scalar_select %p304, %s303, 1
        %s306 = smul.addr %s305, 8
        %s307 = scalar_lea.vmem %s0, %s306
        %p308 = pneg %p54
        %p309 = pneg %p51
        %p310 = scmp.lt.s32.totalorder %s26, 2
        %s311 = scalar_select %p310, %s26, 2
        %s312 = smul.addr %s311, 16
        %s313 = smul.addr %s312, 4
        %s314 = scalar_lea.vmem %s1, %s313
        %p315 = pneg %p80
        %p316 = pneg %p77
        %s317 = sand.u32 %s93, 1
        %s318 = scalar_lea.sflag [#allocation4], %s317
        %s319 = sand.u32 %s93, 1
        %s320 = smul.addr %s319, 64
        %s321 = scalar_lea.vmem [#allocation3], %s320
        %p322 = pneg %p106
        %p323 = pneg %p103
        %p324 = pneg %p127
        %p325 = pneg %p124
        %p326 = pneg %p148
        %p327 = pneg %p145
        %p328 = pneg %p169
        %p329 = pneg %p166
        %p330 = pneg %p190
        %p331 = pneg %p187
        %p332 = pneg %p216
        %p333 = pneg %p213
        %s334 = smul.u32 2, %s25
        %p335 = scmp.lt.s32.totalorder %s334, 1
        %s336 = scalar_select %p335, %s334, 1
        %s337 = smul.addr %s336, 8
        %s338 = scalar_lea.vmem %s7, %s337
        %s339 = smul.u32 2, %s25
        %p340 = scmp.lt.s32.totalorder %s339, 1
        %s341 = scalar_select %p340, %s339, 1
        %s342 = smul.addr %s341, 8
        %s343 = scalar_lea.vmem %s0, %s342
        %s344 = smul.u32 2, %s25
        %p345 = scmp.lt.s32.totalorder %s26, 2
        %s346 = scalar_select %p345, %s26, 2
        %s347 = smul.addr %s346, 16
        %s348 = smul.addr %s347, 4
        %s349 = scalar_lea.vmem %s1, %s348
        %s350 = smul.u32 2, %s25
        %p351 = scmp.lt.s32.totalorder %s350, 1
        %s352 = scalar_select %p351, %s350, 1
        %s353 = smul.addr %s352, 8
        %s354 = scalar_lea.vmem %s7, %s353
        %s355 = smul.u32 2, %s25
        %p356 = scmp.eq.s32.totalorder %s26, 0
        // Predicated region
        $region53: #{residual_mlp_lora_forward.1} parent=47 // pred_check
          %p357 = pneg %p356
        $region54: #{residual_mlp_lora_forward.1} parent=47 // pred_check_branch
          %359 = sbr.rel (%p357) target = $region56
        $region55: #{residual_mlp_lora_forward.1} parent=47 // pred_region
          %v360 = vld [vmem:[%s343] sm:$0xff]
          %v361 = vld [vmem:[%s343 + $0x8] sm:$0xff]
          %362 = vst [vmem:[#allocation2] sm:$0xff] %v360
          %363 = vst [vmem:[#allocation2 + $0x8] sm:$0xff] %v361
        $region56: #{residual_mlp_lora_forward.1} parent=47 // pred_fallthru
          _
        %v364 = vld [vmem:[#allocation2] sm:$0xff]
        %v365 = vld [vmem:[#allocation2 + $0x8] sm:$0xff]
        %v366 = vpack.c.bf16 %v365, %v364
        %v367 = vld [vmem:[%s349] sm:$0xf]
        %v368 = vld [vmem:[%s349 + $0x4] sm:$0xf]
        %v369 = vld [vmem:[%s349 + $0x8] sm:$0xf]
        %v370 = vld [vmem:[%s349 + $0xc] sm:$0xf]
        %v371 = vld [vmem:[%s349 + $0x10] sm:$0xf]
        %v372 = vld [vmem:[%s349 + $0x14] sm:$0xf]
        %v373 = vld [vmem:[%s349 + $0x18] sm:$0xf]
        %v374 = vld [vmem:[%s349 + $0x1c] sm:$0xf]
        %v375 = vld [vmem:[%s349 + $0x20] sm:$0xf]
        %v376 = vld [vmem:[%s349 + $0x24] sm:$0xf]
        %v377 = vld [vmem:[%s349 + $0x28] sm:$0xf]
        %v378 = vld [vmem:[%s349 + $0x2c] sm:$0xf]
        %v379 = vld [vmem:[%s349 + $0x30] sm:$0xf]
        %v380 = vld [vmem:[%s349 + $0x34] sm:$0xf]
        %v381 = vld [vmem:[%s349 + $0x38] sm:$0xf]
        %v382 = vld [vmem:[%s349 + $0x3c] sm:$0xf]
        %s383 = scalar_lea.vmem %s3, %s26
        %v384 = vld [vmem:[%s383] sm:$0x1]
        %v386 = vperm.slane %v384, 0
        %v404 = vunpack.c.l.b16 %v367
        %v405 = vunpack.c.l.b16 %v368
        %v406 = vunpack.c.l.b16 %v369
        %v407 = vunpack.c.l.b16 %v370
        %v408 = vunpack.c.l.b16 %v371
        %v409 = vunpack.c.l.b16 %v372
        %v410 = vunpack.c.l.b16 %v373
        %v411 = vunpack.c.l.b16 %v374
        %v412 = vunpack.c.l.b16 %v375
        %v413 = vunpack.c.l.b16 %v376
        %v414 = vunpack.c.l.b16 %v377
        %v415 = vunpack.c.l.b16 %v378
        %v416 = vunpack.c.l.b16 %v379
        %v417 = vunpack.c.l.b16 %v380
        %v418 = vunpack.c.l.b16 %v381
        %v419 = vunpack.c.l.b16 %v382
        %v420 = vpack.c.b16 %v405, %v404
        %v421 = vpack.c.b16 %v407, %v406
        %v422 = vpack.c.b16 %v409, %v408
        %v423 = vpack.c.b16 %v411, %v410
        %v424 = vpack.c.b16 %v413, %v412
        %v425 = vpack.c.b16 %v415, %v414
        %v426 = vpack.c.b16 %v417, %v416
        %v427 = vpack.c.b16 %v419, %v418
        %436 = vmatpush.bf16.msra.mxu0 %v427
        %437 = vmatpush.bf16.msra.mxu0 %v426
        %438 = vmatpush.bf16.msra.mxu0 %v425
        %439 = vmatpush.bf16.msra.mxu0 %v424
        %440 = vmatpush.bf16.msra.mxu0 %v423
        %441 = vmatpush.bf16.msra.mxu0 %v422
        %442 = vmatpush.bf16.msra.mxu0 %v421
        %443 = vmatpush.bf16.msra.mxu0 %v420
        %444 = vmatmul.bf16.gmra.mxu0 %v366
        %v445 = vpop.f32.mrf.mxu0
        %v446 = vadd.f32 %v386, %v445
        %v447 = vpop.f32.mrf.mxu0
        %v448 = vadd.f32 %v386, %v447
        %449 = vdwg.mxu0
        %v450 = vmax.f32 %v446, 0.0
        %v451 = vmax.f32 %v448, 0.0
        %s452 = smul.u32 %s26, 16
        %s453 = smul.addr %s452, 4
        %s454 = scalar_lea.vmem %s5, %s453
        %v455 = vld [vmem:[%s454] sm:$0xf]
        %v456 = vld [vmem:[%s454 + $0x4] sm:$0xf]
        %v457 = vld [vmem:[%s454 + $0x8] sm:$0xf]
        %v458 = vld [vmem:[%s454 + $0xc] sm:$0xf]
        %v459 = vld [vmem:[%s454 + $0x10] sm:$0xf]
        %v460 = vld [vmem:[%s454 + $0x14] sm:$0xf]
        %v461 = vld [vmem:[%s454 + $0x18] sm:$0xf]
        %v462 = vld [vmem:[%s454 + $0x1c] sm:$0xf]
        %v463 = vld [vmem:[%s454 + $0x20] sm:$0xf]
        %v464 = vld [vmem:[%s454 + $0x24] sm:$0xf]
        %v465 = vld [vmem:[%s454 + $0x28] sm:$0xf]
        %v466 = vld [vmem:[%s454 + $0x2c] sm:$0xf]
        %v467 = vld [vmem:[%s454 + $0x30] sm:$0xf]
        %v468 = vld [vmem:[%s454 + $0x34] sm:$0xf]
        %v469 = vld [vmem:[%s454 + $0x38] sm:$0xf]
        %v470 = vld [vmem:[%s454 + $0x3c] sm:$0xf]
        %v487 = vunpack.c.l.b16 %v455
        %v488 = vunpack.c.l.b16 %v456
        %v489 = vunpack.c.l.b16 %v457
        %v490 = vunpack.c.l.b16 %v458
        %v491 = vunpack.c.l.b16 %v459
        %v492 = vunpack.c.l.b16 %v460
        %v493 = vunpack.c.l.b16 %v461
        %v494 = vunpack.c.l.b16 %v462
        %v495 = vunpack.c.l.b16 %v463
        %v496 = vunpack.c.l.b16 %v464
        %v497 = vunpack.c.l.b16 %v465
        %v498 = vunpack.c.l.b16 %v466
        %v499 = vunpack.c.l.b16 %v467
        %v500 = vunpack.c.l.b16 %v468
        %v501 = vunpack.c.l.b16 %v469
        %v502 = vunpack.c.l.b16 %v470
        %v503 = vpack.c.b16 %v488, %v487
        %v504 = vpack.c.b16 %v490, %v489
        %v505 = vpack.c.b16 %v492, %v491
        %v506 = vpack.c.b16 %v494, %v493
        %v507 = vpack.c.b16 %v496, %v495
        %v508 = vpack.c.b16 %v498, %v497
        %v509 = vpack.c.b16 %v500, %v499
        %v510 = vpack.c.b16 %v502, %v501
        %519 = vmatpush.bf16.msra.mxu0 %v510
        %520 = vmatpush.bf16.msra.mxu0 %v509
        %521 = vmatpush.bf16.msra.mxu0 %v508
        %522 = vmatpush.bf16.msra.mxu0 %v507
        %523 = vmatpush.bf16.msra.mxu0 %v506
        %524 = vmatpush.bf16.msra.mxu0 %v505
        %525 = vmatpush.bf16.msra.mxu0 %v504
        %526 = vmatpush.bf16.msra.mxu0 %v503
        %527 = vmatmul.bf16.gmra.mxu0 %v366
        %v528 = vpop.f32.mrf.mxu0
        %v529 = vadd.f32 0.0, %v528
        %v530 = vpop.f32.mrf.mxu0
        %v531 = vadd.f32 0.0, %v530
        %532 = vdwg.mxu0
        %s533 = smul.u32 %s26, 8
        %s534 = scalar_lea.vmem %s6, %s533
        %v535 = vld [vmem:[%s534] sm:$0xff]
        %vm536 = vcmask 64512
        %v538 = vsel %vm536, %v529, 0
        %v541 = vsel %vm536, %v531, 0
        %543 = vmatpush.msra.mxu0 0.0
        %544 = vmatpush.msra.mxu0 0.0
        %545 = vmatpush.msra.mxu0 0.0
        %546 = vmatpush.msra.mxu0 0.0
        %547 = vmatpush.msra.mxu0 0.0
        %548 = vmatpush.msra.mxu0 0.0
        %549 = vmatpush.msra.mxu0 0.0
        %550 = vmatpush.msra.mxu0 0.0
        %551 = vmatpush.msra.mxu0 0.0
        %552 = vmatpush.msra.mxu0 0.0
        %553 = vmatpush.msra.mxu0 0.0
        %554 = vmatpush.msra.mxu0 0.0
        %555 = vmatpush.msra.mxu0 0.0
        %556 = vmatpush.msra.mxu0 0.0
        %557 = vmatpush.msra.mxu0 0.0
        %558 = vmatpush.msra.mxu0 %v535
        %559 = vmatmul.f32.gmra.mxu0 %v538
        %v560 = vpop.f32.mrf.mxu0
        %v561 = vadd.f32 0.0, %v560
        %562 = vmatmul.f32.gmra.mxu0 %v541
        %v563 = vpop.f32.mrf.mxu0
        %v564 = vadd.f32 0.0, %v563
        %565 = vdwg.mxu0
        %v566 = vadd.f32 %v450, %v561
        %v567 = vadd.f32 %v451, %v564
        %v568 = vpack.c.bf16 %v567, %v566
        %v569 = vld [vmem:[%s297] sm:$0xf]
        %v570 = vld [vmem:[%s297 + $0x4] sm:$0xf]
        %v571 = vld [vmem:[%s297 + $0x8] sm:$0xf]
        %v572 = vld [vmem:[%s297 + $0xc] sm:$0xf]
        %v573 = vld [vmem:[%s297 + $0x10] sm:$0xf]
        %v574 = vld [vmem:[%s297 + $0x14] sm:$0xf]
        %v575 = vld [vmem:[%s297 + $0x18] sm:$0xf]
        %v576 = vld [vmem:[%s297 + $0x1c] sm:$0xf]
        %v577 = vld [vmem:[%s297 + $0x20] sm:$0xf]
        %v578 = vld [vmem:[%s297 + $0x24] sm:$0xf]
        %v579 = vld [vmem:[%s297 + $0x28] sm:$0xf]
        %v580 = vld [vmem:[%s297 + $0x2c] sm:$0xf]
        %v581 = vld [vmem:[%s297 + $0x30] sm:$0xf]
        %v582 = vld [vmem:[%s297 + $0x34] sm:$0xf]
        %v583 = vld [vmem:[%s297 + $0x38] sm:$0xf]
        %v584 = vld [vmem:[%s297 + $0x3c] sm:$0xf]
        %s585 = scalar_lea.vmem %s4, %s26
        %v586 = vld [vmem:[%s585] sm:$0x1]
        %v588 = vperm.slane %v586, 0
        %v606 = vunpack.c.l.b16 %v569
        %v607 = vunpack.c.l.b16 %v570
        %v608 = vunpack.c.l.b16 %v571
        %v609 = vunpack.c.l.b16 %v572
        %v610 = vunpack.c.l.b16 %v573
        %v611 = vunpack.c.l.b16 %v574
        %v612 = vunpack.c.l.b16 %v575
        %v613 = vunpack.c.l.b16 %v576
        %v614 = vunpack.c.l.b16 %v577
        %v615 = vunpack.c.l.b16 %v578
        %v616 = vunpack.c.l.b16 %v579
        %v617 = vunpack.c.l.b16 %v580
        %v618 = vunpack.c.l.b16 %v581
        %v619 = vunpack.c.l.b16 %v582
        %v620 = vunpack.c.l.b16 %v583
        %v621 = vunpack.c.l.b16 %v584
        %v622 = vpack.c.b16 %v607, %v606
        %v623 = vpack.c.b16 %v609, %v608
        %v624 = vpack.c.b16 %v611, %v610
        %v625 = vpack.c.b16 %v613, %v612
        %v626 = vpack.c.b16 %v615, %v614
        %v627 = vpack.c.b16 %v617, %v616
        %v628 = vpack.c.b16 %v619, %v618
        %v629 = vpack.c.b16 %v621, %v620
        %638 = vmatpush.bf16.msra.mxu0 %v629
        %639 = vmatpush.bf16.msra.mxu0 %v628
        %640 = vmatpush.bf16.msra.mxu0 %v627
        %641 = vmatpush.bf16.msra.mxu0 %v626
        %642 = vmatpush.bf16.msra.mxu0 %v625
        %643 = vmatpush.bf16.msra.mxu0 %v624
        %644 = vmatpush.bf16.msra.mxu0 %v623
        %645 = vmatpush.bf16.msra.mxu0 %v622
        %646 = vmatmul.bf16.gmra.mxu0 %v568
        %v647 = vpop.f32.mrf.mxu0
        %v648 = vadd.f32 %v588, %v647
        %v649 = vpop.f32.mrf.mxu0
        %v650 = vadd.f32 %v588, %v649
        %651 = vdwg.mxu0
        %v652 = vadd.f32 %v648, %v364
        %v653 = vadd.f32 %v650, %v365
        %654 = vst [vmem:[#allocation2] sm:$0xff] %v652
        %655 = vst [vmem:[#allocation2 + $0x8] sm:$0xff] %v653
        %p656 = scmp.eq.s32.totalorder %s26, 2
        // Predicated region
        $region57: #{residual_mlp_lora_forward.1} parent=47 // pred_check
          %p657 = pneg %p656
        $region58: #{residual_mlp_lora_forward.1} parent=47 // pred_check_branch
          %659 = sbr.rel (%p657) target = $region60
        $region59: #{residual_mlp_lora_forward.1} parent=47 // pred_region
          %660 = vst [vmem:[%s354] sm:$0xff] %v652
          %661 = vst [vmem:[%s354 + $0x8] sm:$0xff] %v653
        $region60: #{residual_mlp_lora_forward.1} parent=47 // pred_fallthru
          _
        %s662 = smul.u32 2, %s25
        %p663 = scmp.lt.s32.totalorder %s662, 1
        %s664 = scalar_select %p663, %s662, 1
        %s665 = smul.addr %s664, 8
        %s666 = scalar_lea.vmem %s7, %s665
        // Predicated region
        $region61: #{residual_mlp_lora_forward.1} parent=47 // pred_check
          %p667 = pneg %p213
        $region62: #{residual_mlp_lora_forward.1} parent=47 // pred_check_branch
          %669 = sbr.rel (%p667) target = $region64
        $region63: #{residual_mlp_lora_forward.1} parent=47 // pred_region
          %s670 = smul.u32 2, %s25
        $region64: #{residual_mlp_lora_forward.1} parent=47 // pred_fallthru
          _
        // Predicated region
        $region65: #{residual_mlp_lora_forward.1} parent=47 // pred_check
          %p671 = pneg %p213
        $region66: #{residual_mlp_lora_forward.1} parent=47 // pred_check_branch
          %673 = sbr.rel (%p671) target = $region68
        $region67: #{residual_mlp_lora_forward.1} parent=47 // pred_region
          %s674 = smul.u32 2, %s25
          %p675 = scmp.lt.s32.totalorder %s674, 1
          %s676 = scalar_select %p675, %s674, 1
          %s677 = smul.addr %s676, 8
          %s678 = scalar_lea.vmem %s7, %s677
        $region68: #{residual_mlp_lora_forward.1} parent=47 // pred_fallthru
          _
      $region48: #{residual_mlp_lora_forward.1} parent=5 // pred_fallthru
        _
      %p679 = scmp.le.s32.totalorder 2, %s16
      // Predicated region
      $region69: #{residual_mlp_lora_forward.1} parent=5 // pred_check
        %p680 = pneg %p679
      $region70: #{residual_mlp_lora_forward.1} parent=5 // pred_check_branch
        %682 = sbr.rel (%p680) target = $region72
      $region71: #{residual_mlp_lora_forward.1} parent=5 // pred_region
        %s683 = ssub.s32 %s16, 2
      $region72: #{residual_mlp_lora_forward.1} parent=5 // pred_fallthru
        _
    $region6: #{residual_mlp_lora_forward.1} parent=1 // loop_footer
      %s20 = sadd.s32 1, %s16
    $region7: #{residual_mlp_lora_forward.1} parent=1 // loop_footer_branch
      %15 = sbr.rel target = $region3
    $region8: #{residual_mlp_lora_forward.1} parent=1 // loop_exit
      _
    %684 = vsyncpa [#allocation4], 1
    %s685 = scalar_lea.sflag [#allocation4], 1
    %686 = vsyncpa %s685, 1

</llo_original>
